<compile_context>
chip_gen: v7x
topology: tpu7x:2x2x1
jax: 0.10.0
libtpu: 0.0.40
codegen_flags: <defaults>
</compile_context>

<pallas_src>
import jax
import jax.numpy as jnp
from jax import lax
from jax.experimental import pallas as pl
from jax.experimental.pallas import tpu as pltpu

N_JOINTS = 17
N_COORDS = N_JOINTS * 3          # 51 floats per pose; joint j in cols 3j..3j+2
_LANES = 128
_LEFT_PARENTS = (5, 7, 11, 13)   # left bone  = joints[p] - joints[p + 2]
_RIGHT_PARENTS = (6, 8, 12, 14)  # right bone = joints[p] - joints[p + 2]

# ||bone rooted at joint p||^2 lands in column 3p (forward-shift convention)
# or 3p+8 (reverse); the matching right bone is always 3 columns further.
# Which 4 columns hold a valid (left, right) pair therefore depends on the
# hardware lane-rotate direction; both candidate sets are precomputed and one
# is selected once by _roll_setup().
_LEFT_COLS_FWD = tuple(3 * p for p in _LEFT_PARENTS)        # (15, 21, 33, 39)
_LEFT_COLS_REV = tuple(3 * p + 11 for p in _LEFT_PARENTS)   # (26, 32, 44, 50)

_ROLL_CFG = None


def _roll_setup():
    """One-time on-device calibration of pltpu.roll's rotate direction.

    The kernel only needs "shift columns by a few lanes"; whichever direction
    the hardware rotate takes, the valid bone-pair columns are a fixed static
    set, so probe once (outside jit) and bake the matching column set in.
    Falls back to jnp.roll if pltpu.roll misbehaves.
    """
    global _ROLL_CFG
    if _ROLL_CFG is not None:
        return _ROLL_CFG

    use_hw_roll, left_cols = True, _LEFT_COLS_FWD
    try:
        def probe(x_ref, o_ref):
            o_ref[...] = pltpu.roll(x_ref[...], 1, axis=1)

        x = jnp.broadcast_to(jnp.arange(_LANES, dtype=jnp.float32), (8, _LANES))
        out = pl.pallas_call(
            probe, out_shape=jax.ShapeDtypeStruct((8, _LANES), jnp.float32))(x)
        v = float(jax.block_until_ready(out)[0, 1])
        if v == 0.0:            # roll(x, 1)[c] == x[c - 1]  (jnp.roll convention)
            use_hw_roll, left_cols = True, _LEFT_COLS_FWD
        elif v == 2.0:          # roll(x, 1)[c] == x[c + 1]
            use_hw_roll, left_cols = True, _LEFT_COLS_REV
        else:                   # unexpected -> unambiguous jnp.roll fallback
            use_hw_roll, left_cols = False, _LEFT_COLS_FWD
    except Exception:           # roll failed to lower -> jnp.roll fallback
        use_hw_roll, left_cols = False, _LEFT_COLS_FWD

    _ROLL_CFG = (use_hw_roll, left_cols)
    return _ROLL_CFG


def _num_tensorcores():
    """TensorCores addressable by one Pallas grid: 2 on v7x, else 1 (v5e/v6e)."""
    try:
        kind = jax.devices()[0].device_kind.lower()
    except Exception:
        return 1
    return 2 if "v7" in kind else 1


def _round_up(v, m):
    return ((v + m - 1) // m) * m


def _make_kernel(n_rows, tile_rows, tiles_per_core, left_cols, use_hw_roll):
    lc0, lc1, lc2, lc3 = left_cols
    n_full_tiles = n_rows // tile_rows                 # tiles with no padded rows
    rows_in_last = n_rows - n_full_tiles * tile_rows   # 0 => no partial tile
    has_partial = rows_in_last > 0                     # trace-time constant

    def shift(a, k):
        # Move data by k lanes (direction calibrated by _roll_setup(); the
        # `left_cols` set already matches it).  Wrapped lanes only ever feed
        # masked-out columns.
        if use_hw_roll:
            return pltpu.roll(a, _LANES - k, axis=1)
        return jnp.roll(a, -k, axis=1)

    def kernel(x_ref, o_ref, xpad_ref, acc_ref):
        core = pl.program_id(0)
        step = pl.program_id(1)
        tile = core * tiles_per_core + step            # logical batch tile

        @pl.when(step == 0)
        def _init():
            acc_ref[0] = jnp.float32(0.0)

        # One-vreg column predicate (built once per step on a (1, 128) iota,
        # ~8 VALU ops total); jnp.where broadcasts it over all rows, so the
        # per-element masking cost is a single select.
        col = lax.broadcasted_iota(jnp.int32, (1, _LANES), 1)
        col_ok = (col == lc0) | (col == lc1) | (col == lc2) | (col == lc3)

        def pair_terms():
            # Widen the (tile_rows, 51) block to the native 128-lane width via
            # the VMEM scratch.  Lanes 51..127 hold stale data, but they only
            # ever reach the final select (never a multiply), so NaN/Inf there
            # cannot poison the sum.
            xpad_ref[:, 0:N_COORDS] = x_ref[...].astype(jnp.float32)
            x = xpad_ref[...]                          # (tile_rows, 128) f32
            d = x - shift(x, 6)                        # joint_j - joint_{j+2}
            sq = d * d
            s = sq + shift(sq, 1) + shift(sq, 2)       # ||bone||^2 per joint col
            s_pair = shift(s, 3)                       # the paired bone's ||.||^2
            # l/r + r/l = (l^2 + r^2) * rsqrt(l^2 * r^2): one EUP op per pair.
            w = (s + s_pair) * lax.rsqrt(s * s_pair)
            return w * (w - 2.0)                       # (l/r-1)^2 + (r/l-1)^2

        # Full tiles: column mask only, no row mask.
        @pl.when(tile < n_full_tiles)
        def _full_tile():
            acc_ref[0] += jnp.sum(jnp.where(col_ok, pair_terms(), 0.0))

        if has_partial:
            # Only the single trailing partial tile pays for a row predicate;
            # over-provisioned (core, step) pairs beyond it skip compute.
            @pl.when(tile == n_full_tiles)
            def _partial_tile():
                row = lax.broadcasted_iota(jnp.int32, (tile_rows, _LANES), 0)
                ok = col_ok & (row < rows_in_last)
                acc_ref[0] += jnp.sum(jnp.where(ok, pair_terms(), 0.0))

        # Scalar accumulation lives in SMEM; the (8, 128) output block is
        # written exactly once per core, at its last grid step.
        @pl.when(step == tiles_per_core - 1)
        def _finalize():
            r8 = lax.broadcasted_iota(jnp.int32, (8, _LANES), 0)
            c8 = lax.broadcasted_iota(jnp.int32, (8, _LANES), 1)
            o_ref[...] = jnp.where((r8 == 0) & (c8 == 0), acc_ref[0], 0.0)

    return kernel


def symloss_forward(inp, block_rows=4096, n_cores=None):
    """Scalar symloss for `inp` of any shape with numel divisible by 51."""
    x = jnp.reshape(inp, (-1, N_COORDS))
    n_rows = int(x.shape[0])

    use_hw_roll, left_cols = _roll_setup()
    if n_cores is None:
        n_cores = _num_tensorcores()

    # Batch tile: multiple of 16 rows (f32/bf16 sublane tiles), big enough to
    # amortize the ~0.35us per-grid-step overhead, small enough that the two
    # lane-padded input buffers + the 128-lane f32 scratch stay ~6 MiB at the
    # 4096-row default -- comfortably inside the default scoped VMEM on v5e
    # (16 MiB), v6e and v7x (32 MiB).
    tile_rows = max(16, min(_round_up(block_rows, 16), _round_up(n_rows, 16)))
    if n_cores > 1:
        # Make sure every TensorCore gets at least one tile of real work.
        per_core_rows = max(16, _round_up(pl.cdiv(n_rows, n_cores), 16))
        tile_rows = min(tile_rows, per_core_rows)
    n_tiles = pl.cdiv(n_rows, tile_rows)
    n_cores = max(1, min(n_cores, n_tiles))
    tiles_per_core = pl.cdiv(n_tiles, n_cores)

    def x_index(core, step):
        # Clamp so over-provisioned (core, step) pairs re-read the last real
        # block; their compute is skipped inside the kernel.
        return (jnp.minimum(core * tiles_per_core + step, n_tiles - 1), 0)

    kernel = _make_kernel(n_rows, tile_rows, tiles_per_core, left_cols,
                          use_hw_roll)
    cost = pl.CostEstimate(
        flops=11 * _LANES * tile_rows * n_tiles,
        transcendentals=_LANES * tile_rows * n_tiles,
        bytes_accessed=n_rows * N_COORDS * jnp.dtype(x.dtype).itemsize
        + n_cores * 8 * _LANES * 4,
    )

    partials = pl.pallas_call(
        kernel,
        out_shape=jax.ShapeDtypeStruct((n_cores * 8, _LANES), jnp.float32),
        grid=(n_cores, tiles_per_core),
        in_specs=[pl.BlockSpec((tile_rows, N_COORDS), x_index)],
        out_specs=pl.BlockSpec((8, _LANES), lambda core, step: (core, 0)),
        scratch_shapes=[pltpu.VMEM((tile_rows, _LANES), jnp.float32),
                        pltpu.SMEM((1,), jnp.float32)],
        compiler_params=pltpu.CompilerParams(
            dimension_semantics=("parallel", "arbitrary")),
        cost_estimate=cost,
    )(x)

    # MSE over the (B, 8) "total" tensor == sum of pair terms / (8 * B).
    return jnp.sum(partials) / jnp.float32(8 * n_rows)


def _reference(inp):
    # pure-JAX mirror of the PyTorch module, for correctness checking
    nj = jnp.reshape(inp, (-1, N_JOINTS, 3)).astype(jnp.float32)
    lp = jnp.array(_LEFT_PARENTS)
    ls = jnp.array([p + 2 for p in _LEFT_PARENTS])
    rp = jnp.array(_RIGHT_PARENTS)
    rs = jnp.array([p + 2 for p in _RIGHT_PARENTS])
    lb = jnp.linalg.norm(nj[:, lp, :] - nj[:, ls, :], axis=2)
    rb = jnp.linalg.norm(nj[:, rp, :] - nj[:, rs, :], axis=2)
    total = jnp.concatenate([lb / rb, rb / lb], axis=1)
    return jnp.mean((total - 1.0) ** 2)


if __name__ == "__main__":
    # small pose batch consistent with the module: (batch, 17 joints, xyz)
    x_small = jax.random.normal(jax.random.PRNGKey(0), (2, 17, 3),
                                dtype=jnp.float32)
    loss = jax.block_until_ready(symloss_forward(x_small))
    ref = jax.block_until_ready(_reference(x_small))
    assert jnp.allclose(loss, ref, rtol=1e-4, atol=1e-4), (loss, ref)

    # multi-tile path with a forced 2-wide core axis: exercises the grid, both
    # per-core accumulators, tile clamping, the skipped over-provisioned tile
    # and the partial last tile (300 rows over 64-row tiles -> 5 real tiles).
    x_multi = jax.random.normal(jax.random.PRNGKey(1), (300, 17, 3),
                                dtype=jnp.float32)
    loss_m = jax.block_until_ready(
        symloss_forward(x_multi, block_rows=64, n_cores=2))
    ref_m = jax.block_until_ready(_reference(x_multi))
    assert jnp.allclose(loss_m, ref_m, rtol=1e-4, atol=1e-4), (loss_m, ref_m)

    # exact-multiple path: no partial tile, one tile per core, init+finalize in
    # the same grid step.
    x_even = jax.random.normal(jax.random.PRNGKey(2), (128, 17, 3),
                               dtype=jnp.float32)
    loss_e = jax.block_until_ready(
        symloss_forward(x_even, block_rows=64, n_cores=2))
    ref_e = jax.block_until_ready(_reference(x_even))
    assert jnp.allclose(loss_e, ref_e, rtol=1e-4, atol=1e-4), (loss_e, ref_e)

    print("KERNEL_OK")
</pallas_src>

<mosaic_0001>
module attributes {stable_mosaic.version = 11 : i64} {
  func.func @probe(%arg0: memref<8x128xf32, #tpu.memory_space<vmem>>, %arg1: memref<8x128xf32, #tpu.memory_space<vmem>>) attributes {dimension_semantics = [], scalar_prefetch = 0 : i64, scratch_operands = 0 : i64, tpu.core_type = #tpu.core_type<tc>} {
    %c0 = arith.constant 0 : index
    %c0_0 = arith.constant 0 : index
    %0 = vector.load %arg0[%c0, %c0_0] : memref<8x128xf32, #tpu.memory_space<vmem>>, vector<8x128xf32>
    %c1_i32 = arith.constant 1 : i32
    %1 = tpu.dynamic_rotate %0 by %c1_i32 dim 1 : vector<8x128xf32>, i32 -> vector<8x128xf32>
    %c0_1 = arith.constant 0 : index
    %c0_2 = arith.constant 0 : index
    %2 = vector.load %arg1[%c0_1, %c0_2] : memref<8x128xf32, #tpu.memory_space<vmem>>, vector<8x128xf32>
    tpu.vector_store %arg1[%c0_1, %c0_2], %1 {strides = array<i32>} : memref<8x128xf32, #tpu.memory_space<vmem>>, vector<8x128xf32>,
    return
  }
}

module attributes {stable_mosaic.version = 11 : i64} {
  func.func @kernel(%arg0: i32, %arg1: i32, %arg2: memref<16x51xf32, #tpu.memory_space<vmem>>, %arg3: memref<8x128xf32, #tpu.memory_space<vmem>>, %arg4: memref<16x128xf32, #tpu.memory_space<vmem>>, %arg5: memref<1xf32, #tpu.memory_space<smem>>) attributes {dimension_semantics = [#tpu.dimension_semantics<parallel>, #tpu.dimension_semantics<arbitrary>], iteration_bounds = array<i64: 1, 1>, scalar_prefetch = 0 : i64, scratch_operands = 2 : i64, tpu.core_type = #tpu.core_type<tc>, window_params = [{transform_indices = @transform_0, window_bounds = array<i64: 16, 51>}, {transform_indices = @transform_1, window_bounds = array<i64: 8, 128>}]} {
    %c1_i32 = arith.constant 1 : i32
    %0 = arith.muli %arg0, %c1_i32 : i32
    %1 = arith.addi %0, %arg1 : i32
    %c0_i32 = arith.constant 0 : i32
    %2 = arith.cmpi eq, %arg1, %c0_i32 : i32
    %3 = arith.extui %2 : i1 to i32
    %c0_i32_0 = arith.constant 0 : i32
    %4 = arith.cmpi ne, %3, %c0_i32_0 : i32
    scf.if %4 {
      %cst = arith.constant 0.000000e+00 : f32
      %c0 = arith.constant 0 : index
      %26 = memref.load %arg5[%c0] : memref<1xf32, #tpu.memory_space<smem>>
      memref.store %cst, %arg5[%c0] : memref<1xf32, #tpu.memory_space<smem>>
    } else {
    }
    %5 = tpu.iota {dimensions = array<i32: 1>} : vector<1x128xi32>
    %c15_i32 = arith.constant 15 : i32
    %6 = vector.broadcast %c15_i32 : i32 to vector<1x128xi32>
    %7 = arith.cmpi eq, %5, %6 : vector<1x128xi32>
    %c21_i32 = arith.constant 21 : i32
    %8 = vector.broadcast %c21_i32 : i32 to vector<1x128xi32>
    %9 = arith.cmpi eq, %5, %8 : vector<1x128xi32>
    %10 = arith.ori %7, %9 : vector<1x128xi1>
    %c33_i32 = arith.constant 33 : i32
    %11 = vector.broadcast %c33_i32 : i32 to vector<1x128xi32>
    %12 = arith.cmpi eq, %5, %11 : vector<1x128xi32>
    %13 = arith.ori %10, %12 : vector<1x128xi1>
    %c39_i32 = arith.constant 39 : i32
    %14 = vector.broadcast %c39_i32 : i32 to vector<1x128xi32>
    %15 = arith.cmpi eq, %5, %14 : vector<1x128xi32>
    %16 = arith.ori %13, %15 : vector<1x128xi1>
    %c0_i32_1 = arith.constant 0 : i32
    %17 = arith.cmpi slt, %1, %c0_i32_1 : i32
    %18 = arith.extui %17 : i1 to i32
    %c0_i32_2 = arith.constant 0 : i32
    %19 = arith.cmpi ne, %18, %c0_i32_2 : i32
    scf.if %19 {
      %c0 = arith.constant 0 : index
      %26 = memref.load %arg5[%c0] : memref<1xf32, #tpu.memory_space<smem>>
      %c0_7 = arith.constant 0 : index
      %c0_8 = arith.constant 0 : index
      %27 = vector.load %arg2[%c0_7, %c0_8] : memref<16x51xf32, #tpu.memory_space<vmem>>, vector<16x51xf32>
      %c0_9 = arith.constant 0 : index
      %c0_10 = arith.constant 0 : index
      %28 = vector.load %arg4[%c0_9, %c0_10] : memref<16x128xf32, #tpu.memory_space<vmem>>, vector<16x51xf32>
      tpu.vector_store %arg4[%c0_9, %c0_10], %27 {strides = array<i32>} : memref<16x128xf32, #tpu.memory_space<vmem>>, vector<16x51xf32>,
      %c0_11 = arith.constant 0 : index
      %c0_12 = arith.constant 0 : index
      %29 = vector.load %arg4[%c0_11, %c0_12] : memref<16x128xf32, #tpu.memory_space<vmem>>, vector<16x128xf32>
      %30 = vector.extract_strided_slice %29 {offsets = [0, 6], sizes = [16, 122], strides = [1, 1]} : vector<16x128xf32> to vector<16x122xf32>
      %31 = vector.extract_strided_slice %29 {offsets = [0, 0], sizes = [16, 6], strides = [1, 1]} : vector<16x128xf32> to vector<16x6xf32>
      %32 = tpu.concatenate %30, %31 in 1 : vector<16x122xf32>, vector<16x6xf32> -> vector<16x128xf32>
      %33 = arith.subf %29, %32 : vector<16x128xf32>
      %34 = arith.mulf %33, %33 : vector<16x128xf32>
      %35 = vector.extract_strided_slice %34 {offsets = [0, 1], sizes = [16, 127], strides = [1, 1]} : vector<16x128xf32> to vector<16x127xf32>
      %36 = vector.extract_strided_slice %34 {offsets = [0, 0], sizes = [16, 1], strides = [1, 1]} : vector<16x128xf32> to vector<16x1xf32>
      %37 = tpu.concatenate %35, %36 in 1 : vector<16x127xf32>, vector<16x1xf32> -> vector<16x128xf32>
      %38 = arith.addf %34, %37 : vector<16x128xf32>
      %39 = vector.extract_strided_slice %34 {offsets = [0, 2], sizes = [16, 126], strides = [1, 1]} : vector<16x128xf32> to vector<16x126xf32>
      %40 = vector.extract_strided_slice %34 {offsets = [0, 0], sizes = [16, 2], strides = [1, 1]} : vector<16x128xf32> to vector<16x2xf32>
      %41 = tpu.concatenate %39, %40 in 1 : vector<16x126xf32>, vector<16x2xf32> -> vector<16x128xf32>
      %42 = arith.addf %38, %41 : vector<16x128xf32>
      %43 = vector.extract_strided_slice %42 {offsets = [0, 3], sizes = [16, 125], strides = [1, 1]} : vector<16x128xf32> to vector<16x125xf32>
      %44 = vector.extract_strided_slice %42 {offsets = [0, 0], sizes = [16, 3], strides = [1, 1]} : vector<16x128xf32> to vector<16x3xf32>
      %45 = tpu.concatenate %43, %44 in 1 : vector<16x125xf32>, vector<16x3xf32> -> vector<16x128xf32>
      %46 = arith.addf %42, %45 : vector<16x128xf32>
      %47 = arith.mulf %42, %45 : vector<16x128xf32>
      %48 = math.rsqrt %47 : vector<16x128xf32>
      %49 = arith.mulf %46, %48 : vector<16x128xf32>
      %cst = arith.constant 2.000000e+00 : f32
      %50 = vector.broadcast %cst : f32 to vector<16x128xf32>
      %51 = arith.subf %49, %50 : vector<16x128xf32>
      %52 = arith.mulf %49, %51 : vector<16x128xf32>
      %cst_13 = arith.constant 0.000000e+00 : f32
      %53 = vector.shape_cast %16 : vector<1x128xi1> to vector<1x128xi1>
      %54 = vector.broadcast %53 : vector<1x128xi1> to vector<16x128xi1>
      %55 = vector.broadcast %cst_13 : f32 to vector<16x128xf32>
      %56 = arith.select %54, %52, %55 : vector<16x128xi1>, vector<16x128xf32>
      %57 = vector.shape_cast %56 : vector<16x128xf32> to vector<1x16x128xf32>
      %cst_14 = arith.constant dense<0.000000e+00> : vector<1xf32>
      %58 = vector.multi_reduction <add>, %57, %cst_14 [1, 2] : vector<1x16x128xf32> to vector<1xf32>
      %59 = vector.shape_cast %58 : vector<1xf32> to vector<1x1x1xf32>
      %60 = vector.extract %59[0, 0, 0] : f32 from vector<1x1x1xf32>
      %61 = arith.addf %26, %60 : f32
      %c0_15 = arith.constant 0 : index
      %62 = memref.load %arg5[%c0_15] : memref<1xf32, #tpu.memory_space<smem>>
      memref.store %61, %arg5[%c0_15] : memref<1xf32, #tpu.memory_space<smem>>
    } else {
    }
    %c0_i32_3 = arith.constant 0 : i32
    %20 = arith.cmpi eq, %1, %c0_i32_3 : i32
    %21 = arith.extui %20 : i1 to i32
    %c0_i32_4 = arith.constant 0 : i32
    %22 = arith.cmpi ne, %21, %c0_i32_4 : i32
    scf.if %22 {
      %26 = tpu.iota {dimensions = array<i32: 0>} : vector<16x128xi32>
      %c2_i32 = arith.constant 2 : i32
      %27 = vector.broadcast %c2_i32 : i32 to vector<16x128xi32>
      %28 = arith.cmpi slt, %26, %27 : vector<16x128xi32>
      %29 = vector.broadcast %16 : vector<1x128xi1> to vector<16x128xi1>
      %30 = arith.andi %29, %28 : vector<16x128xi1>
      %c0 = arith.constant 0 : index
      %31 = memref.load %arg5[%c0] : memref<1xf32, #tpu.memory_space<smem>>
      %c0_7 = arith.constant 0 : index
      %c0_8 = arith.constant 0 : index
      %32 = vector.load %arg2[%c0_7, %c0_8] : memref<16x51xf32, #tpu.memory_space<vmem>>, vector<16x51xf32>
      %c0_9 = arith.constant 0 : index
      %c0_10 = arith.constant 0 : index
      %33 = vector.load %arg4[%c0_9, %c0_10] : memref<16x128xf32, #tpu.memory_space<vmem>>, vector<16x51xf32>
      tpu.vector_store %arg4[%c0_9, %c0_10], %32 {strides = array<i32>} : memref<16x128xf32, #tpu.memory_space<vmem>>, vector<16x51xf32>,
      %c0_11 = arith.constant 0 : index
      %c0_12 = arith.constant 0 : index
      %34 = vector.load %arg4[%c0_11, %c0_12] : memref<16x128xf32, #tpu.memory_space<vmem>>, vector<16x128xf32>
      %35 = vector.extract_strided_slice %34 {offsets = [0, 6], sizes = [16, 122], strides = [1, 1]} : vector<16x128xf32> to vector<16x122xf32>
      %36 = vector.extract_strided_slice %34 {offsets = [0, 0], sizes = [16, 6], strides = [1, 1]} : vector<16x128xf32> to vector<16x6xf32>
      %37 = tpu.concatenate %35, %36 in 1 : vector<16x122xf32>, vector<16x6xf32> -> vector<16x128xf32>
      %38 = arith.subf %34, %37 : vector<16x128xf32>
      %39 = arith.mulf %38, %38 : vector<16x128xf32>
      %40 = vector.extract_strided_slice %39 {offsets = [0, 1], sizes = [16, 127], strides = [1, 1]} : vector<16x128xf32> to vector<16x127xf32>
      %41 = vector.extract_strided_slice %39 {offsets = [0, 0], sizes = [16, 1], strides = [1, 1]} : vector<16x128xf32> to vector<16x1xf32>
      %42 = tpu.concatenate %40, %41 in 1 : vector<16x127xf32>, vector<16x1xf32> -> vector<16x128xf32>
      %43 = arith.addf %39, %42 : vector<16x128xf32>
      %44 = vector.extract_strided_slice %39 {offsets = [0, 2], sizes = [16, 126], strides = [1, 1]} : vector<16x128xf32> to vector<16x126xf32>
      %45 = vector.extract_strided_slice %39 {offsets = [0, 0], sizes = [16, 2], strides = [1, 1]} : vector<16x128xf32> to vector<16x2xf32>
      %46 = tpu.concatenate %44, %45 in 1 : vector<16x126xf32>, vector<16x2xf32> -> vector<16x128xf32>
      %47 = arith.addf %43, %46 : vector<16x128xf32>
      %48 = vector.extract_strided_slice %47 {offsets = [0, 3], sizes = [16, 125], strides = [1, 1]} : vector<16x128xf32> to vector<16x125xf32>
      %49 = vector.extract_strided_slice %47 {offsets = [0, 0], sizes = [16, 3], strides = [1, 1]} : vector<16x128xf32> to vector<16x3xf32>
      %50 = tpu.concatenate %48, %49 in 1 : vector<16x125xf32>, vector<16x3xf32> -> vector<16x128xf32>
      %51 = arith.addf %47, %50 : vector<16x128xf32>
      %52 = arith.mulf %47, %50 : vector<16x128xf32>
      %53 = math.rsqrt %52 : vector<16x128xf32>
      %54 = arith.mulf %51, %53 : vector<16x128xf32>
      %cst = arith.constant 2.000000e+00 : f32
      %55 = vector.broadcast %cst : f32 to vector<16x128xf32>
      %56 = arith.subf %54, %55 : vector<16x128xf32>
      %57 = arith.mulf %54, %56 : vector<16x128xf32>
      %cst_13 = arith.constant 0.000000e+00 : f32
      %58 = vector.broadcast %cst_13 : f32 to vector<16x128xf32>
      %59 = arith.select %30, %57, %58 : vector<16x128xi1>, vector<16x128xf32>
      %60 = vector.shape_cast %59 : vector<16x128xf32> to vector<1x16x128xf32>
      %cst_14 = arith.constant dense<0.000000e+00> : vector<1xf32>
      %61 = vector.multi_reduction <add>, %60, %cst_14 [1, 2] : vector<1x16x128xf32> to vector<1xf32>
      %62 = vector.shape_cast %61 : vector<1xf32> to vector<1x1x1xf32>
      %63 = vector.extract %62[0, 0, 0] : f32 from vector<1x1x1xf32>
      %64 = arith.addf %31, %63 : f32
      %c0_15 = arith.constant 0 : index
      %65 = memref.load %arg5[%c0_15] : memref<1xf32, #tpu.memory_space<smem>>
      memref.store %64, %arg5[%c0_15] : memref<1xf32, #tpu.memory_space<smem>>
    } else {
    }
    %c0_i32_5 = arith.constant 0 : i32
    %23 = arith.cmpi eq, %arg1, %c0_i32_5 : i32
    %24 = arith.extui %23 : i1 to i32
    %c0_i32_6 = arith.constant 0 : i32
    %25 = arith.cmpi ne, %24, %c0_i32_6 : i32
    scf.if %25 {
      %26 = tpu.iota {dimensions = array<i32: 0>} : vector<8x128xi32>
      %27 = tpu.iota {dimensions = array<i32: 1>} : vector<8x128xi32>
      %c0_i32_7 = arith.constant 0 : i32
      %28 = vector.broadcast %c0_i32_7 : i32 to vector<8x128xi32>
      %29 = arith.cmpi eq, %26, %28 : vector<8x128xi32>
      %c0_i32_8 = arith.constant 0 : i32
      %30 = vector.broadcast %c0_i32_8 : i32 to vector<8x128xi32>
      %31 = arith.cmpi eq, %27, %30 : vector<8x128xi32>
      %32 = arith.andi %29, %31 : vector<8x128xi1>
      %c0 = arith.constant 0 : index
      %33 = memref.load %arg5[%c0] : memref<1xf32, #tpu.memory_space<smem>>
      %cst = arith.constant 0.000000e+00 : f32
      %34 = vector.broadcast %33 : f32 to vector<8x128xf32>
      %35 = vector.broadcast %cst : f32 to vector<8x128xf32>
      %36 = arith.select %32, %34, %35 : vector<8x128xi1>, vector<8x128xf32>
      %c0_9 = arith.constant 0 : index
      %c0_10 = arith.constant 0 : index
      %37 = vector.load %arg3[%c0_9, %c0_10] : memref<8x128xf32, #tpu.memory_space<vmem>>, vector<8x128xf32>
      tpu.vector_store %arg3[%c0_9, %c0_10], %36 {strides = array<i32>} : memref<8x128xf32, #tpu.memory_space<vmem>>, vector<8x128xf32>,
    } else {
    }
    return
  }
  func.func @transform_0(%arg0: i32, %arg1: i32) -> (i32, i32) {
    %c1_i32 = arith.constant 1 : i32
    %0 = arith.muli %arg0, %c1_i32 : i32
    %1 = arith.addi %0, %arg1 : i32
    %c0_i32 = arith.constant 0 : i32
    %2 = arith.minsi %1, %c0_i32 : i32
    %c0_i32_0 = arith.constant 0 : i32
    %c0_i32_1 = arith.constant 0 : i32
    return %2, %c0_i32_0 : i32, i32
  }
  func.func @transform_1(%arg0: i32, %arg1: i32) -> (i32, i32) {
    %c0_i32 = arith.constant 0 : i32
    %c0_i32_0 = arith.constant 0 : i32
    return %arg0, %c0_i32 : i32, i32
  }
}

</mosaic_0001>

<llo_original>
// kernel: tpu_custom_call.1
$region0: #{tpu_custom_call.1}
  #allocation0 [shape = 'u32[]', space=smem, size = 0x4, offset = 0x4, fixed_abs, tag = 'smem constant byte address 0x4 - core index']
  #allocation1 [shape = 'u32[144,128]{1,0:T(1,128)}', space=vmem, size = 0x12000, scoped, tag = 'internal scratch']
  %s0 = inlined_call_operand.hbm [shape: f32[8,128], index: 0, kind: input, shape index: {}]
  %s1 = inlined_call_operand.hbm [shape: f32[8,128], index: 1, kind: output, shape index: {}]
  %s2 = sld [smem:[#allocation0]]
  $region18: #{tpu_custom_call.1} parent=0
    _
  %s4 = ssub.s32 1, %s2
  %s5 = scalar_select 0, %s4, %s2
  $region1: #{tpu_custom_call.1} parent=0
    #allocation2 [shape = 'u8[4096]{0}', space=vmem, size = 0x1000, scoped, tag = 'input window, operand 0, single buffered']
    #allocation3 [shape = 's32[1]{0}', space=sflag, size = 0x4, scoped, tag = 'scoped memory for tpu_custom_call.1']
    #allocation4 [shape = 's32[1]{0}', space=sflag, size = 0x4, scoped, tag = 'scoped memory for tpu_custom_call.1']
    #allocation5 [shape = 'u8[4096]{0}', space=vmem, size = 0x1000, scoped, tag = 'output window, operand 0, single buffered']
    %6 = vsyncpa [#allocation3], 0
    %7 = vsyncpa [#allocation4], 0
    // Predicated region
    $region2: #{tpu_custom_call.1} parent=1 // pred_check
      _
    $region3: #{tpu_custom_call.1} parent=1 // pred_check_branch
      %9 = sbr.rel (0) target = $region5
    $region4: #{tpu_custom_call.1} parent=1 // pred_region
      %s11 = ssub.s32 128, 128
      %12 = vsyncadd [#allocation3], %s11
      %s14 = sshll.u32 [#allocation2], 4
      %s15 = int_to_ptr.vmem [resolvable:$true] %s14
      %17 = dma.hbm_to_vmem [thread:$0]  %s0, 128, %s15, [#allocation3]
    $region5: #{tpu_custom_call.1} parent=1 // pred_fallthru
      _
    // Predicated region
    $region6: #{tpu_custom_call.1} parent=1 // pred_check
      _
    $region7: #{tpu_custom_call.1} parent=1 // pred_check_branch
      %19 = sbr.rel (0) target = $region9
    $region8: #{tpu_custom_call.1} parent=1 // pred_region
      %20 = dma.done [#allocation3], 128
    $region9: #{tpu_custom_call.1} parent=1 // pred_fallthru
      _
    %v21 = vld [vmem:[#allocation2] sm:$0xff]
    %22 = vrot.lane.b32.xlu0 %v21, 1
    %v23 = vpop.permute.xlu0 %22
    %24 = vst [vmem:[#allocation5] sm:$0xff] %v23
    // Predicated region
    $region10: #{tpu_custom_call.1} parent=1 // pred_check
      _
    $region11: #{tpu_custom_call.1} parent=1 // pred_check_branch
      %26 = sbr.rel (0) target = $region13
    $region12: #{tpu_custom_call.1} parent=1 // pred_region
      %s28 = ssub.s32 128, 128
      %29 = vsyncadd [#allocation4], %s28
      %s31 = sshll.u32 [#allocation5], 4
      %s32 = int_to_ptr.vmem [resolvable:$true] %s31
      %34 = dma.vmem_to_hbm [thread:$0]  %s32, 128, %s1, [#allocation4]
    $region13: #{tpu_custom_call.1} parent=1 // pred_fallthru
      _
    // Predicated region
    $region14: #{tpu_custom_call.1} parent=1 // pred_check
      _
    $region15: #{tpu_custom_call.1} parent=1 // pred_check_branch
      %36 = sbr.rel (0) target = $region17
    $region16: #{tpu_custom_call.1} parent=1 // pred_region
      %37 = dma.done [#allocation4], 128
    $region17: #{tpu_custom_call.1} parent=1 // pred_fallthru
      _
    %38 = vsyncpa [#allocation3], 1
    %39 = vsyncpa [#allocation4], 1

// kernel: tpu_custom_call.1
$region0: #{tpu_custom_call.1}
  #allocation0 [shape = 'u32[]', space=smem, size = 0x4, offset = 0x4, fixed_abs, tag = 'smem constant byte address 0x4 - core index']
  #allocation1 [shape = 'u32[144,128]{1,0:T(1,128)}', space=vmem, size = 0x12000, scoped, tag = 'internal scratch']
  #allocation2 [shape = 'f32[16,128]{1,0:T(8,128)}', space=vmem, size = 0x2000, scoped, tag = 'scratch operand']
  #allocation3 [shape = 'f32[1]{0:T(128)}', space=smem, size = 0x200, scoped, tag = 'scratch operand']
  %s0 = inlined_call_operand.hbm [shape: f32[2,51], index: 0, kind: input, shape index: {}]
  %s1 = inlined_call_operand.hbm [shape: f32[8,128], index: 1, kind: output, shape index: {}]
  %s2 = sld [smem:[#allocation0]]
  $region34: #{tpu_custom_call.1} parent=0
    _
  %s4 = ssub.s32 1, %s2
  %s5 = scalar_select 0, %s4, %s2
  $region1: #{tpu_custom_call.1} parent=0
    #allocation4 [shape = 'u8[8192]{0}', space=vmem, size = 0x2000, scoped, tag = 'input window, operand 0, single buffered']
    #allocation5 [shape = 's32[1]{0}', space=sflag, size = 0x4, scoped, tag = 'scoped memory for tpu_custom_call.1']
    #allocation6 [shape = 's32[1]{0}', space=sflag, size = 0x4, scoped, tag = 'scoped memory for tpu_custom_call.1']
    #allocation7 [shape = 'u8[4096]{0}', space=vmem, size = 0x1000, scoped, tag = 'output window, operand 0, single buffered']
    %6 = vsyncpa [#allocation5], 0
    %7 = vsyncpa [#allocation6], 0
    // Predicated region
    $region2: #{tpu_custom_call.1} parent=1 // pred_check
      _
    $region3: #{tpu_custom_call.1} parent=1 // pred_check_branch
      %9 = sbr.rel (0) target = $region5
    $region4: #{tpu_custom_call.1} parent=1 // pred_region
      %s10 = sadd.s32 0, 0
      %p11 = scmp.lt.s32.totalorder %s10, 0
      %s12 = scalar_select %p11, %s10, 0
      %s13 = smul.u32 8, %s12
      %s14 = ssub.s32 1, %s13
      %s15 = smul.u32 32, %s14
      %s17 = ssub.s32 256, %s15
      %18 = vsyncadd [#allocation5], %s17
      %p19 = scmp.ne.s32.totalorder 0, %s15
      %s20 = smul.addr %s13, 32
      %s21 = scalar_lea.hbm %s0, %s20
      %s22 = smul.u32 2, %s14
      %s23 = sshll.u32 [#allocation4], 4
      %s24 = int_to_ptr.vmem [resolvable:$true] %s23
      %s25 = sshll.u32 %s22, 4
      %29 = dma.hbm_to_vmem [thread:$0]  (%p19), %s21, %s25, %s24, [#allocation5], 32, 32, 2
    $region5: #{tpu_custom_call.1} parent=1 // pred_fallthru
      _
    // Predicated region
    $region6: #{tpu_custom_call.1} parent=1 // pred_check
      _
    $region7: #{tpu_custom_call.1} parent=1 // pred_check_branch
      %31 = sbr.rel (0) target = $region9
    $region8: #{tpu_custom_call.1} parent=1 // pred_region
      %32 = dma.done [#allocation5], 256
    $region9: #{tpu_custom_call.1} parent=1 // pred_fallthru
      _
    %s33 = sadd.s32 0, 0
    %p34 = scmp.lt.s32.totalorder %s33, 0
    %s35 = scalar_select %p34, %s33, 0
    %s36 = smul.u32 8, %s35
    %s37 = ssub.s32 1, %s36
    %s38 = smul.u32 32, %s37
    %s39 = sadd.s32 0, 0
    %p40 = scmp.eq.s32.totalorder 0, 0
    // Predicated region
    $region10: #{tpu_custom_call.1} parent=1 // pred_check
      %p41 = pneg %p40
    $region11: #{tpu_custom_call.1} parent=1 // pred_check_branch
      %43 = sbr.rel (%p41) target = $region13
    $region12: #{tpu_custom_call.1} parent=1 // pred_region
      %s44 = scalar_lea.smem [#allocation3], 0
      %45 = sst [smem:[%s44]] 0.0
    $region13: #{tpu_custom_call.1} parent=1 // pred_fallthru
      _
    %v46 = vlaneseq
    %v47 = vand.u32 %v46, 127
    %vm48 = vcmp.eq.s32.totalorder %v47, 15
    %vm49 = vcmp.eq.s32.totalorder %v47, 21
    %vm50 = vmor %vm48, %vm49
    %vm51 = vcmp.eq.s32.totalorder %v47, 33
    %vm52 = vmor %vm50, %vm51
    %vm53 = vcmp.eq.s32.totalorder %v47, 39
    %vm54 = vmor %vm52, %vm53
    %p55 = scmp.lt.s32.totalorder %s39, 0
    // Predicated region
    $region14: #{tpu_custom_call.1} parent=1 // pred_check
      %p56 = pneg %p55
    $region15: #{tpu_custom_call.1} parent=1 // pred_check_branch
      %58 = sbr.rel (%p56) target = $region17
    $region16: #{tpu_custom_call.1} parent=1 // pred_region
      %s59 = sld [smem:[#allocation3]]
      %v60 = vld [vmem:[#allocation4] sm:$0xff]
      %v61 = vld [vmem:[#allocation4 + $0x8] sm:$0xff]
      %vm62 = vcmask 416768
      %63 = vst.msk [vmem:[#allocation2] sm:$0xff] %vm62, %v60
      %64 = vst.msk [vmem:[#allocation2 + $0x8] sm:$0xff] %vm62, %v61
      %v65 = vld [vmem:[#allocation2] sm:$0xff]
      %v66 = vld [vmem:[#allocation2 + $0x8] sm:$0xff]
      %69 = vrot.lane.b32.xlu0 %v65, 122
      %v70 = vpop.permute.xlu0 %69
      %71 = vrot.lane.b32.xlu0 %v66, 122
      %v72 = vpop.permute.xlu0 %71
      %v75 = vsub.f32 %v65, %v70
      %v76 = vsub.f32 %v66, %v72
      %v77 = vmul.f32 %v75, %v75
      %v78 = vmul.f32 %v76, %v76
      %81 = vrot.lane.b32.xlu0 %v77, 127
      %v82 = vpop.permute.xlu0 %81
      %83 = vrot.lane.b32.xlu0 %v78, 127
      %v84 = vpop.permute.xlu0 %83
      %v87 = vadd.f32 %v77, %v82
      %v88 = vadd.f32 %v78, %v84
      %89 = vrot.lane.b32.xlu0 %v77, 126
      %v90 = vpop.permute.xlu0 %89
      %91 = vrot.lane.b32.xlu0 %v78, 126
      %v92 = vpop.permute.xlu0 %91
      %v95 = vadd.f32 %v87, %v90
      %v96 = vadd.f32 %v88, %v92
      %99 = vrot.lane.b32.xlu0 %v95, 125
      %v100 = vpop.permute.xlu0 %99
      %101 = vrot.lane.b32.xlu0 %v96, 125
      %v102 = vpop.permute.xlu0 %101
      %v105 = vadd.f32 %v95, %v100
      %v106 = vadd.f32 %v96, %v102
      %v107 = vmul.f32 %v95, %v100
      %v108 = vmul.f32 %v96, %v102
      %v109 = vrsqrt.pop %v107
      %v110 = vrsqrt.pop %v108
      %v111 = vmul.f32 %v105, %v109
      %v112 = vmul.f32 %v106, %v110
      %v113 = vsub.f32 %v111, 2.0
      %v114 = vsub.f32 %v112, 2.0
      %v115 = vmul.f32 %v111, %v113
      %v116 = vmul.f32 %v112, %v114
      %v117 = vsel %vm54, 1, 0
      %vm118 = vcmp.eq.s32.totalorder %v117, 1
      %v119 = vsel %vm118, %v115, 0.0
      %v120 = vsel %vm118, %v116, 0.0
      %v121 = vadd.f32 %v119, %v120
      %122 = vadd.xlane.f32.xlu0 %v121
      %v123 = vpop.xlane.xlu0 %122
      %v124 = vrot.slane %v123, 4
      %v125 = vadd.f32 %v123, %v124
      %v126 = vrot.slane %v125, 2
      %v127 = vadd.f32 %v125, %v126
      %v128 = vrot.slane %v127, 1
      %v129 = vadd.f32 %v127, %v128
      %s130 = vtos %v129
      %s131 = sadd.f32 %s59, %s130
      %s132 = scalar_lea.smem [#allocation3], 0
      %133 = sst [smem:[%s132]] %s131
    $region17: #{tpu_custom_call.1} parent=1 // pred_fallthru
      _
    %p134 = scmp.eq.s32.totalorder %s39, 0
    // Predicated region
    $region18: #{tpu_custom_call.1} parent=1 // pred_check
      %p135 = pneg %p134
    $region19: #{tpu_custom_call.1} parent=1 // pred_check_branch
      %137 = sbr.rel (%p135) target = $region21
    $region20: #{tpu_custom_call.1} parent=1 // pred_region
      %v138 = vlaneseq
      %v139 = vshrl.u32 %v138, 7
      %v140 = vadd.s32 %v139, 8
      %vm141 = vcmp.lt.s32.totalorder %v139, 2
      %vm142 = vcmp.lt.s32.totalorder %v140, 2
      %v143 = vsel %vm54, 1, 0
      %vm144 = vcmp.eq.s32.totalorder %v143, 1
      %vm145 = vmand %vm144, %vm141
      %vm146 = vmand %vm144, %vm142
      %s147 = sld [smem:[#allocation3]]
      %v148 = vld [vmem:[#allocation4] sm:$0xff]
      %v149 = vld [vmem:[#allocation4 + $0x8] sm:$0xff]
      %vm150 = vcmask 416768
      %151 = vst.msk [vmem:[#allocation2] sm:$0xff] %vm150, %v148
      %152 = vst.msk [vmem:[#allocation2 + $0x8] sm:$0xff] %vm150, %v149
      %v153 = vld [vmem:[#allocation2] sm:$0xff]
      %v154 = vld [vmem:[#allocation2 + $0x8] sm:$0xff]
      %157 = vrot.lane.b32.xlu0 %v153, 122
      %v158 = vpop.permute.xlu0 %157
      %159 = vrot.lane.b32.xlu0 %v154, 122
      %v160 = vpop.permute.xlu0 %159
      %v163 = vsub.f32 %v153, %v158
      %v164 = vsub.f32 %v154, %v160
      %v165 = vmul.f32 %v163, %v163
      %v166 = vmul.f32 %v164, %v164
      %169 = vrot.lane.b32.xlu0 %v165, 127
      %v170 = vpop.permute.xlu0 %169
      %171 = vrot.lane.b32.xlu0 %v166, 127
      %v172 = vpop.permute.xlu0 %171
      %v175 = vadd.f32 %v165, %v170
      %v176 = vadd.f32 %v166, %v172
      %177 = vrot.lane.b32.xlu0 %v165, 126
      %v178 = vpop.permute.xlu0 %177
      %179 = vrot.lane.b32.xlu0 %v166, 126
      %v180 = vpop.permute.xlu0 %179
      %v183 = vadd.f32 %v175, %v178
      %v184 = vadd.f32 %v176, %v180
      %187 = vrot.lane.b32.xlu0 %v183, 125
      %v188 = vpop.permute.xlu0 %187
      %189 = vrot.lane.b32.xlu0 %v184, 125
      %v190 = vpop.permute.xlu0 %189
      %v193 = vadd.f32 %v183, %v188
      %v194 = vadd.f32 %v184, %v190
      %v195 = vmul.f32 %v183, %v188
      %v196 = vmul.f32 %v184, %v190
      %v197 = vrsqrt.pop %v195
      %v198 = vrsqrt.pop %v196
      %v199 = vmul.f32 %v193, %v197
      %v200 = vmul.f32 %v194, %v198
      %v201 = vsub.f32 %v199, 2.0
      %v202 = vsub.f32 %v200, 2.0
      %v203 = vmul.f32 %v199, %v201
      %v204 = vmul.f32 %v200, %v202
      %v205 = vsel %vm145, %v203, 0.0
      %v206 = vsel %vm146, %v204, 0.0
      %v207 = vadd.f32 %v205, %v206
      %208 = vadd.xlane.f32.xlu0 %v207
      %v209 = vpop.xlane.xlu0 %208
      %v210 = vrot.slane %v209, 4
      %v211 = vadd.f32 %v209, %v210
      %v212 = vrot.slane %v211, 2
      %v213 = vadd.f32 %v211, %v212
      %v214 = vrot.slane %v213, 1
      %v215 = vadd.f32 %v213, %v214
      %s216 = vtos %v215
      %s217 = sadd.f32 %s147, %s216
      %s218 = scalar_lea.smem [#allocation3], 0
      %219 = sst [smem:[%s218]] %s217
    $region21: #{tpu_custom_call.1} parent=1 // pred_fallthru
      _
    // Predicated region
    $region22: #{tpu_custom_call.1} parent=1 // pred_check
      %p220 = pneg %p40
    $region23: #{tpu_custom_call.1} parent=1 // pred_check_branch
      %222 = sbr.rel (%p220) target = $region25
    $region24: #{tpu_custom_call.1} parent=1 // pred_region
      %v223 = vlaneseq
      %v224 = vshrl.u32 %v223, 7
      %vm225 = vcmp.eq.s32.totalorder %v224, 0
      %vm226 = vcmp.eq.s32.totalorder %v47, 0
      %vm227 = vmand %vm225, %vm226
      %s228 = sld [smem:[#allocation3]]
      %v229 = vstv %s228
      %v230 = vsel %vm227, %v229, 0.0
      %231 = vst [vmem:[#allocation7] sm:$0xff] %v230
    $region25: #{tpu_custom_call.1} parent=1 // pred_fallthru
      _
    // Predicated region
    $region26: #{tpu_custom_call.1} parent=1 // pred_check
      _
    $region27: #{tpu_custom_call.1} parent=1 // pred_check_branch
      %233 = sbr.rel (0) target = $region29
    $region28: #{tpu_custom_call.1} parent=1 // pred_region
      %s235 = ssub.s32 128, 128
      %236 = vsyncadd [#allocation6], %s235
      %s238 = sshll.u32 [#allocation7], 4
      %s239 = int_to_ptr.vmem [resolvable:$true] %s238
      %241 = dma.vmem_to_hbm [thread:$0]  %s239, 128, %s1, [#allocation6]
    $region29: #{tpu_custom_call.1} parent=1 // pred_fallthru
      _
    // Predicated region
    $region30: #{tpu_custom_call.1} parent=1 // pred_check
      _
    $region31: #{tpu_custom_call.1} parent=1 // pred_check_branch
      %243 = sbr.rel (0) target = $region33
    $region32: #{tpu_custom_call.1} parent=1 // pred_region
      %244 = dma.done [#allocation6], 128
    $region33: #{tpu_custom_call.1} parent=1 // pred_fallthru
      _
    %245 = vsyncpa [#allocation5], 1
    %246 = vsyncpa [#allocation6], 1

</llo_original>
